<compile_context>
chip_gen: v5e
topology: v5e:2x2
jax: 0.10.0
libtpu: 0.0.40
codegen_flags: <defaults>
</compile_context>

<pallas_src>
import functools

import jax
import jax.numpy as jnp
from jax.experimental import pallas as pl
from jax.experimental.pallas import tpu as pltpu


def _round_up(x, m):
    return ((x + m - 1) // m) * m


def _detect_num_tensorcores():
    """2 on dual-TensorCore chips (v7x), else 1 (v5e/v6e). Defensive fallback."""
    try:
        kind = jax.devices()[0].device_kind.lower()
        if "v7" in kind:
            return 2
    except Exception:
        pass
    return 1


def _detect_vmem_bytes():
    """Physical per-core VMEM; conservative 64 MiB fallback (v7x size)."""
    try:
        return int(pltpu.get_tpu_info().vmem_capacity_bytes)
    except Exception:
        return 64 * 1024 * 1024


def _focal_loss_kernel(logits_ref, tgt_ref, out_ref, *, alpha, gamma, n_valid,
                       tile_n, tiles_per_core):
    c = pl.program_id(0)          # parallel axis (per-TensorCore on dual-TC chips)
    i = pl.program_id(1)          # arbitrary (reduction) axis over batch tiles

    @pl.when(i == 0)
    def _init():                  # zero this core's resident accumulator block
        out_ref[...] = jnp.zeros_like(out_ref)

    x = logits_ref[...].astype(jnp.float32)        # (tile_n, Cp); bf16 inputs up-cast here
    t = tgt_ref[...]                               # (tile_n, 1) int32 targets

    # Numerically-stable log-softmax cross entropy, per sample.
    m = jnp.max(x, axis=-1, keepdims=True)                              # (tile_n, 1)
    shifted = x - m                                                     # (tile_n, Cp)
    lse = jnp.log(jnp.sum(jnp.exp(shifted), axis=-1, keepdims=True))    # (tile_n, 1)

    # Gather the target logit via a select + row-sum (no dynamic lane gather on
    # TPU; select is cheaper than one-hot cast + multiply).
    cols = jax.lax.broadcasted_iota(jnp.int32, x.shape, 1)              # (tile_n, Cp)
    logit_t = jnp.sum(jnp.where(cols == t, shifted, 0.0),
                      axis=-1, keepdims=True)                           # (tile_n, 1)

    ce = jnp.maximum(lse - logit_t, 0.0)           # CE >= 0; guards pow NaN
    pt = jnp.exp(-ce)                              # in (0, 1]
    base = jnp.maximum(1.0 - pt, 0.0)

    # Static-gamma specialization: integer gamma -> repeated multiply (no exp/log).
    if float(gamma) == float(int(gamma)) and int(gamma) >= 0:
        w = jnp.ones_like(base)
        for _ in range(int(gamma)):
            w = w * base
    else:
        w = jnp.power(base, gamma)

    focal = alpha * w * ce                          # (tile_n, 1)

    # Mask rows past the true batch size.  Ragged / clamped-duplicate tiles load
    # unspecified data; this SELECT (not multiply) zeroes any NaN/Inf they produce.
    row0 = (c * tiles_per_core + i) * tile_n
    rows = row0 + jax.lax.broadcasted_iota(jnp.int32, focal.shape, 0)
    focal = jnp.where(rows < n_valid, focal, 0.0)

    # Accumulate this tile's SUM into the per-core output block (broadcast scalar).
    out_ref[...] += jnp.sum(focal)


def focal_loss(logits, targets, alpha=1.0, gamma=2.0, *, tile_n_max=2048,
               num_cores=None):
    """Focal loss (scalar) from logits.

    logits:  (N, C) float32 or bfloat16 (bf16 halves HBM traffic; math stays f32).
    targets: (N,)   integer class indices.
    """
    N, C = logits.shape
    itemsize = jnp.dtype(logits.dtype).itemsize

    if num_cores is None:
        num_cores = _detect_num_tensorcores()
    num_cores = max(1, int(num_cores))

    # Pad the class dim to one full 128-lane tile only for small-C models.  The
    # -1e30 fill contributes exp()~0 to the LSE and never matches a real target,
    # so the result is unchanged; for C >= 128 a full-extent last-dim block is
    # legal and we avoid any HBM copy of the logits.
    if C < 128:
        Cp = 128
        logits = jnp.pad(logits, ((0, 0), (0, Cp - C)), constant_values=-1e30)
    else:
        Cp = C

    targets2d = targets.astype(jnp.int32).reshape(N, 1)

    vmem_phys = _detect_vmem_bytes()
    # Budget for picking tile_n, counting what actually lands in VMEM:
    #   2x double-buffered (tile_n, Cp) logits blocks
    #   2x double-buffered (tile_n, 1)  target blocks, lane-padded to 128 lanes
    #   ~4 compiler-materialized (tile_n, Cp) f32 intermediates (shifted/exp/iota/select)
    tile_budget = max(12 << 20, min(56 << 20, vmem_phys // 2 - (8 << 20)))
    bytes_per_row = 2 * Cp * itemsize + 2 * 128 * 4 + 4 * Cp * 4

    rows_per_core = pl.cdiv(N, num_cores)
    cap = max(8, (tile_budget // bytes_per_row) // 8 * 8)
    tile_n = max(8, min(int(tile_n_max), cap, _round_up(rows_per_core, 8)))

    total_tiles = pl.cdiv(N, tile_n)            # no batch padding: ragged last tile
    tiles_per_core = pl.cdiv(total_tiles, num_cores)
    last_tile = total_tiles - 1

    out_rows = num_cores * 8   # one (8,128)-aligned accumulator block per core

    needed_bytes = (2 * tile_n * Cp * itemsize       # double-buffered logits tiles
                    + 2 * tile_n * 128 * 4           # lane-padded target tiles (x2)
                    + 4 * tile_n * Cp * 4            # compiler f32 intermediates
                    + out_rows * 128 * 4)            # resident output accumulators
    vmem_limit = max(32 << 20, needed_bytes + (8 << 20))
    vmem_limit = min(vmem_limit, vmem_phys - (8 << 20))    # headroom for Mosaic scratch
    vmem_limit = int(max(vmem_limit, needed_bytes + (2 << 20)))

    cost = pl.CostEstimate(
        flops=int(8 * N * Cp),
        transcendentals=int(N * Cp + 3 * N),
        bytes_accessed=int(N * Cp * itemsize + N * 4 + out_rows * 128 * 4),
    )

    def _tile_map(c, i):
        # Clamp so grid points past the last real tile re-read the final tile;
        # their rows are >= N and the in-kernel mask zeroes their contribution.
        return (jnp.minimum(c * tiles_per_core + i, last_tile), 0)

    kernel = functools.partial(
        _focal_loss_kernel, alpha=float(alpha), gamma=float(gamma),
        n_valid=N, tile_n=tile_n, tiles_per_core=tiles_per_core)

    partials = pl.pallas_call(
        kernel,
        out_shape=jax.ShapeDtypeStruct((out_rows, 128), jnp.float32),
        grid=(num_cores, tiles_per_core),
        in_specs=[
            pl.BlockSpec((tile_n, Cp), _tile_map),
            pl.BlockSpec((tile_n, 1), _tile_map),
        ],
        out_specs=pl.BlockSpec((8, 128), lambda c, i: (c, 0)),
        compiler_params=pltpu.CompilerParams(
            dimension_semantics=("parallel", "arbitrary"),
            vmem_limit_bytes=vmem_limit),
        cost_estimate=cost,
    )(logits, targets2d)

    # Each core's (8,128) block holds its partial sum broadcast over the whole
    # block (zero-init + scalar-broadcast adds only), so one representative
    # element per core is exact; divide by the true N for the unbiased mean.
    per_core = partials.reshape(num_cores, 8, 128)[:, 0, 0]
    return jnp.sum(per_core) / N


def _reference_focal_loss(logits, targets, alpha=1.0, gamma=2.0):
    """Pure-JAX reference mirroring F.cross_entropy + focal weighting."""
    logp = jax.nn.log_softmax(logits.astype(jnp.float32), axis=-1)
    ce = -jnp.take_along_axis(logp, targets[:, None].astype(jnp.int32), axis=-1)[:, 0]
    pt = jnp.exp(-ce)
    return jnp.mean(alpha * (1.0 - pt) ** gamma * ce)


if __name__ == "__main__":
    key = jax.random.PRNGKey(0)
    k_logits, k_targets = jax.random.split(key)

    N, C = 8, 32  # batch=8, num_classes=32
    logits = jax.random.normal(k_logits, (N, C), dtype=jnp.float32)
    targets = jax.random.randint(k_targets, (N,), 0, C, dtype=jnp.int32)

    loss = focal_loss(logits, targets, alpha=1.0, gamma=2.0)
    loss = jax.block_until_ready(loss)

    ref = _reference_focal_loss(logits, targets, alpha=1.0, gamma=2.0)
    assert jnp.allclose(loss, ref, atol=1e-5, rtol=1e-5), (loss, ref)

    print("KERNEL_OK")
</pallas_src>

<mosaic_0001>
module attributes {stable_mosaic.version = 11 : i64} {
  func.func @_focal_loss_kernel(%arg0: i32, %arg1: i32, %arg2: memref<8x128xf32, #tpu.memory_space<vmem>>, %arg3: memref<8x1xi32, #tpu.memory_space<vmem>>, %arg4: memref<8x128xf32, #tpu.memory_space<vmem>>) attributes {dimension_semantics = [#tpu.dimension_semantics<parallel>, #tpu.dimension_semantics<arbitrary>], iteration_bounds = array<i64: 1, 1>, scalar_prefetch = 0 : i64, scratch_operands = 0 : i64, tpu.core_type = #tpu.core_type<tc>, window_params = [{transform_indices = @transform_0, window_bounds = array<i64: 8, 128>}, {transform_indices = @transform_1, window_bounds = array<i64: 8, 1>}, {transform_indices = @transform_2, window_bounds = array<i64: 8, 128>}]} {
    %c0_i32 = arith.constant 0 : i32
    %0 = arith.cmpi eq, %arg1, %c0_i32 : i32
    %1 = arith.extui %0 : i1 to i32
    %c0_i32_0 = arith.constant 0 : i32
    %2 = arith.cmpi ne, %1, %c0_i32_0 : i32
    scf.if %2 {
      %cst_20 = arith.constant 0.000000e+00 : f32
      %54 = vector.broadcast %cst_20 : f32 to vector<8x128xf32>
      %c0_21 = arith.constant 0 : index
      %c0_22 = arith.constant 0 : index
      %55 = vector.load %arg4[%c0_21, %c0_22] : memref<8x128xf32, #tpu.memory_space<vmem>>, vector<8x128xf32>
      tpu.vector_store %arg4[%c0_21, %c0_22], %54 {strides = array<i32>} : memref<8x128xf32, #tpu.memory_space<vmem>>, vector<8x128xf32>,
    } else {
    }
    %c0 = arith.constant 0 : index
    %c0_1 = arith.constant 0 : index
    %3 = vector.load %arg2[%c0, %c0_1] : memref<8x128xf32, #tpu.memory_space<vmem>>, vector<8x128xf32>
    %c0_2 = arith.constant 0 : index
    %c0_3 = arith.constant 0 : index
    %4 = vector.load %arg3[%c0_2, %c0_3] : memref<8x1xi32, #tpu.memory_space<vmem>>, vector<8x1xi32>
    %cst = arith.constant dense<0xFF800000> : vector<8xf32>
    %5 = vector.multi_reduction <maximumf>, %3, %cst [1] : vector<8x128xf32> to vector<8xf32>
    %6 = vector.shape_cast %5 : vector<8xf32> to vector<8x1xf32>
    %7 = vector.broadcast %6 : vector<8x1xf32> to vector<8x128xf32>
    %8 = arith.subf %3, %7 : vector<8x128xf32>
    %9 = math.exp %8 : vector<8x128xf32>
    %cst_4 = arith.constant dense<0.000000e+00> : vector<8xf32>
    %10 = vector.multi_reduction <add>, %9, %cst_4 [1] : vector<8x128xf32> to vector<8xf32>
    %11 = vector.shape_cast %10 : vector<8xf32> to vector<8x1xf32>
    %12 = math.log %11 : vector<8x1xf32>
    %13 = tpu.iota {dimensions = array<i32: 1>} : vector<8x128xi32>
    %14 = vector.broadcast %4 : vector<8x1xi32> to vector<8x128xi32>
    %15 = arith.cmpi eq, %13, %14 : vector<8x128xi32>
    %cst_5 = arith.constant 0.000000e+00 : f32
    %16 = vector.broadcast %cst_5 : f32 to vector<8x128xf32>
    %17 = arith.select %15, %8, %16 : vector<8x128xi1>, vector<8x128xf32>
    %cst_6 = arith.constant dense<0.000000e+00> : vector<8xf32>
    %18 = vector.multi_reduction <add>, %17, %cst_6 [1] : vector<8x128xf32> to vector<8xf32>
    %19 = vector.shape_cast %18 : vector<8xf32> to vector<8x1xf32>
    %20 = arith.subf %12, %19 : vector<8x1xf32>
    %cst_7 = arith.constant 0.000000e+00 : f32
    %21 = vector.broadcast %cst_7 : f32 to vector<8x1xf32>
    %22 = arith.maximumf %20, %21 : vector<8x1xf32>
    %cst_8 = arith.constant 0.000000e+00 : f32
    %23 = vector.broadcast %cst_8 : f32 to vector<8x1xf32>
    %24 = arith.subf %23, %22 : vector<8x1xf32>
    %25 = math.exp %24 : vector<8x1xf32>
    %cst_9 = arith.constant 1.000000e+00 : f32
    %26 = vector.broadcast %cst_9 : f32 to vector<8x1xf32>
    %27 = arith.subf %26, %25 : vector<8x1xf32>
    %cst_10 = arith.constant 0.000000e+00 : f32
    %28 = vector.broadcast %cst_10 : f32 to vector<8x1xf32>
    %29 = arith.maximumf %27, %28 : vector<8x1xf32>
    %cst_11 = arith.constant 1.000000e+00 : f32
    %30 = vector.broadcast %cst_11 : f32 to vector<8x1xf32>
    %31 = arith.mulf %30, %29 : vector<8x1xf32>
    %32 = arith.mulf %31, %29 : vector<8x1xf32>
    %cst_12 = arith.constant 1.000000e+00 : f32
    %33 = vector.broadcast %cst_12 : f32 to vector<8x1xf32>
    %34 = arith.mulf %33, %32 : vector<8x1xf32>
    %35 = arith.mulf %34, %22 : vector<8x1xf32>
    %c1_i32 = arith.constant 1 : i32
    %36 = arith.muli %arg0, %c1_i32 : i32
    %37 = arith.addi %36, %arg1 : i32
    %c8_i32 = arith.constant 8 : i32
    %38 = arith.muli %37, %c8_i32 : i32
    %39 = tpu.iota {dimensions = array<i32: 0>} : vector<8x1xi32>
    %40 = vector.broadcast %38 : i32 to vector<8x1xi32>
    %41 = arith.addi %40, %39 : vector<8x1xi32>
    %c8_i32_13 = arith.constant 8 : i32
    %42 = vector.broadcast %c8_i32_13 : i32 to vector<8x1xi32>
    %43 = arith.cmpi slt, %41, %42 : vector<8x1xi32>
    %cst_14 = arith.constant 0.000000e+00 : f32
    %44 = vector.broadcast %cst_14 : f32 to vector<8x1xf32>
    %45 = arith.select %43, %35, %44 : vector<8x1xi1>, vector<8x1xf32>
    %c0_15 = arith.constant 0 : index
    %c0_16 = arith.constant 0 : index
    %46 = vector.load %arg4[%c0_15, %c0_16] : memref<8x128xf32, #tpu.memory_space<vmem>>, vector<8x128xf32>
    %47 = vector.shape_cast %45 : vector<8x1xf32> to vector<1x8x1xf32>
    %cst_17 = arith.constant dense<0.000000e+00> : vector<1xf32>
    %48 = vector.multi_reduction <add>, %47, %cst_17 [1, 2] : vector<1x8x1xf32> to vector<1xf32>
    %49 = vector.shape_cast %48 : vector<1xf32> to vector<1x1x1xf32>
    %50 = vector.extract %49[0, 0, 0] : f32 from vector<1x1x1xf32>
    %51 = vector.broadcast %50 : f32 to vector<8x128xf32>
    %52 = arith.addf %46, %51 : vector<8x128xf32>
    %c0_18 = arith.constant 0 : index
    %c0_19 = arith.constant 0 : index
    %53 = vector.load %arg4[%c0_18, %c0_19] : memref<8x128xf32, #tpu.memory_space<vmem>>, vector<8x128xf32>
    tpu.vector_store %arg4[%c0_18, %c0_19], %52 {strides = array<i32>} : memref<8x128xf32, #tpu.memory_space<vmem>>, vector<8x128xf32>,
    return
  }
  func.func @transform_0(%arg0: i32, %arg1: i32) -> (i32, i32) {
    %c1_i32 = arith.constant 1 : i32
    %0 = arith.muli %arg0, %c1_i32 : i32
    %1 = arith.addi %0, %arg1 : i32
    %c0_i32 = arith.constant 0 : i32
    %2 = arith.minsi %1, %c0_i32 : i32
    %c0_i32_0 = arith.constant 0 : i32
    %c0_i32_1 = arith.constant 0 : i32
    return %2, %c0_i32_0 : i32, i32
  }
  func.func @transform_1(%arg0: i32, %arg1: i32) -> (i32, i32) {
    %c1_i32 = arith.constant 1 : i32
    %0 = arith.muli %arg0, %c1_i32 : i32
    %1 = arith.addi %0, %arg1 : i32
    %c0_i32 = arith.constant 0 : i32
    %2 = arith.minsi %1, %c0_i32 : i32
    %c0_i32_0 = arith.constant 0 : i32
    %c0_i32_1 = arith.constant 0 : i32
    return %2, %c0_i32_0 : i32, i32
  }
  func.func @transform_2(%arg0: i32, %arg1: i32) -> (i32, i32) {
    %c0_i32 = arith.constant 0 : i32
    %c0_i32_0 = arith.constant 0 : i32
    return %arg0, %c0_i32 : i32, i32
  }
}

</mosaic_0001>

<llo_original>
// kernel: tpu_custom_call.1
$region0: #{tpu_custom_call.1}
  #allocation0 [shape = 'u32[]', space=smem, size = 0x4, offset = 0x4, fixed_abs, tag = 'smem constant byte address 0x4 - core index']
  #allocation1 [shape = 'u32[72,128]{1,0:T(1,128)}', space=vmem, size = 0x9000, scoped, tag = 'internal scratch']
  %s0 = inlined_call_operand.vmem [shape: f32[8,128], index: 0, kind: input, shape index: {}]
  %s1 = inlined_call_operand.vmem [shape: s32[8,1], index: 1, kind: input, shape index: {}]
  %s2 = inlined_call_operand.hbm [shape: f32[8,128], index: 2, kind: output, shape index: {}]
  %s3 = sld [smem:[#allocation0]]
  $region22: #{tpu_custom_call.1} parent=0
    _
  %s5 = ssub.s32 1, %s3
  %s6 = scalar_select 0, %s5, %s3
  $region1: #{tpu_custom_call.1} parent=0
    #allocation2 [shape = 'u8[4096]{0}', space=vmem, size = 0x1000, scoped, tag = 'output window, operand 0, single buffered']
    #allocation3 [shape = 's32[1]{0}', space=sflag, size = 0x4, scoped, tag = 'scoped memory for tpu_custom_call.1']
    %7 = vsyncpa [#allocation3], 0
    // Predicated region
    $region2: #{tpu_custom_call.1} parent=1 // pred_check
      _
    $region3: #{tpu_custom_call.1} parent=1 // pred_check_branch
      %9 = sbr.rel (0) target = $region5
    $region4: #{tpu_custom_call.1} parent=1 // pred_region
      %s10 = sadd.s32 0, 0
      %p11 = scmp.lt.s32.totalorder %s10, 0
      %s12 = scalar_select %p11, %s10, 0
      %p13 = scmp.lt.s32.totalorder %s12, 0
      %s14 = scalar_select %p13, %s12, 0
      %s15 = smul.addr %s14, 8
      %s16 = scalar_lea.vmem %s0, %s15
      %s17 = sadd.s32 0, 0
      %p18 = scmp.lt.s32.totalorder %s17, 0
      %s19 = scalar_select %p18, %s17, 0
    $region5: #{tpu_custom_call.1} parent=1 // pred_fallthru
      _
    // Predicated region
    $region6: #{tpu_custom_call.1} parent=1 // pred_check
      _
    $region7: #{tpu_custom_call.1} parent=1 // pred_check_branch
      %21 = sbr.rel (0) target = $region9
    $region8: #{tpu_custom_call.1} parent=1 // pred_region
      %s22 = sadd.s32 0, 0
      %p23 = scmp.lt.s32.totalorder %s22, 0
      %s24 = scalar_select %p23, %s22, 0
      %p25 = scmp.lt.s32.totalorder %s24, 0
      %s26 = scalar_select %p25, %s24, 0
      %s27 = smul.addr %s26, 8
      %s28 = scalar_lea.vmem %s1, %s27
      %s29 = sadd.s32 0, 0
      %p30 = scmp.lt.s32.totalorder %s29, 0
      %s31 = scalar_select %p30, %s29, 0
    $region9: #{tpu_custom_call.1} parent=1 // pred_fallthru
      _
    %s32 = sadd.s32 0, 0
    %p33 = scmp.lt.s32.totalorder %s32, 0
    %s34 = scalar_select %p33, %s32, 0
    %p35 = scmp.lt.s32.totalorder %s34, 0
    %s36 = scalar_select %p35, %s34, 0
    %s37 = smul.addr %s36, 8
    %s38 = scalar_lea.vmem %s0, %s37
    %s39 = sadd.s32 0, 0
    %p40 = scmp.lt.s32.totalorder %s39, 0
    %s41 = scalar_select %p40, %s39, 0
    %p42 = scmp.lt.s32.totalorder %s41, 0
    %s43 = scalar_select %p42, %s41, 0
    %s44 = smul.addr %s43, 8
    %s45 = scalar_lea.vmem %s1, %s44
    %s46 = sadd.s32 0, 0
    %p47 = scmp.lt.s32.totalorder %s46, 0
    %s48 = scalar_select %p47, %s46, 0
    %p49 = scmp.lt.s32.totalorder %s48, 0
    %s50 = scalar_select %p49, %s48, 0
    %s51 = smul.addr %s50, 8
    %s52 = scalar_lea.vmem %s0, %s51
    %s53 = sadd.s32 0, 0
    %p54 = scmp.lt.s32.totalorder %s53, 0
    %s55 = scalar_select %p54, %s53, 0
    %s56 = sadd.s32 0, 0
    %p57 = scmp.lt.s32.totalorder %s56, 0
    %s58 = scalar_select %p57, %s56, 0
    %p59 = scmp.lt.s32.totalorder %s58, 0
    %s60 = scalar_select %p59, %s58, 0
    %s61 = smul.addr %s60, 8
    %s62 = scalar_lea.vmem %s1, %s61
    %s63 = sadd.s32 0, 0
    %p64 = scmp.lt.s32.totalorder %s63, 0
    %s65 = scalar_select %p64, %s63, 0
    %p66 = scmp.eq.s32.totalorder 0, 0
    // Predicated region
    $region10: #{tpu_custom_call.1} parent=1 // pred_check
      %p67 = pneg %p66
    $region11: #{tpu_custom_call.1} parent=1 // pred_check_branch
      %69 = sbr.rel (%p67) target = $region13
    $region12: #{tpu_custom_call.1} parent=1 // pred_region
      %70 = vst [vmem:[#allocation2] sm:$0xff] 0.0
    $region13: #{tpu_custom_call.1} parent=1 // pred_fallthru
      _
    %v71 = vld [vmem:[%s52] sm:$0xff]
    %v72 = vld [vmem:[%s62] sm:$0xff]
    %73 = vmax.xlane.f32.xlu0 %v71
    %v74 = vpop.xlane.xlu0 %73
    %v75 = vsub.f32 %v71, %v74
    %v76 = vmul.f32 %v75, 1.442695
    %v77 = vpow.pop %v76
    %78 = vadd.xlane.f32.xlu0 %v77
    %v79 = vpop.xlane.xlu0 %78
    %v80 = vlog2.pop %v79
    %v81 = vmul.f32 %v80, 0.6931472
    %v82 = vlaneseq
    %v83 = vand.u32 %v82, 127
    %84 = vset.pattern.permute.xlu0 0
    %85 = vperm.xlu0 %84, %v72
    %v86 = vpop.permute.xlu0 %85
    %vm87 = vcmp.eq.s32.totalorder %v83, %v86
    %v88 = vsel %vm87, %v75, 0.0
    %89 = vadd.xlane.f32.xlu0 %v88
    %v90 = vpop.xlane.xlu0 %89
    %v91 = vsub.f32 %v81, %v90
    %v92 = vmax.f32 %v91, 0.0
    %v93 = vsub.f32 0.0, %v92
    %v94 = vmul.f32 %v93, 1.442695
    %v95 = vpow.pop %v94
    %v96 = vsub.f32 1.0, %v95
    %v97 = vmax.f32 %v96, 0.0
    %v98 = vmul.f32 %v97, %v97
    %v99 = vmul.f32 %v98, %v92
    %s100 = sadd.s32 0, 0
    %s101 = smul.u32 %s100, 8
    %v102 = vlaneseq
    %v103 = vshrl.u32 %v102, 7
    %v104 = vstv %s101
    %v105 = vadd.s32 %v104, %v103
    %vm106 = vcmp.lt.s32.totalorder %v105, 8
    %v107 = vsel %vm106, %v99, 0.0
    %v108 = vld [vmem:[#allocation2] sm:$0xff]
    %vm109 = vcmask 7168
    %v110 = vsel %vm109, %v107, 0.0
    %111 = vadd.xlane.f32.xlu0 %v110
    %v112 = vpop.xlane.xlu0 %111
    %v113 = vrot.slane %v112, 4
    %v114 = vadd.f32 %v112, %v113
    %v115 = vrot.slane %v114, 2
    %v116 = vadd.f32 %v114, %v115
    %v117 = vrot.slane %v116, 1
    %v118 = vadd.f32 %v116, %v117
    %s119 = vtos %v118
    %v120 = vstv %s119
    %v121 = vadd.f32 %v108, %v120
    %122 = vst [vmem:[#allocation2] sm:$0xff] %v121
    // Predicated region
    $region14: #{tpu_custom_call.1} parent=1 // pred_check
      _
    $region15: #{tpu_custom_call.1} parent=1 // pred_check_branch
      %124 = sbr.rel (0) target = $region17
    $region16: #{tpu_custom_call.1} parent=1 // pred_region
      %126 = vsyncadd [#allocation3], 0
      %s128 = sshll.u32 [#allocation2], 4
      %s129 = int_to_ptr.vmem [resolvable:$true] %s128
      %s130 = sshll.u32 %s2, 4
      %s131 = int_to_ptr.hbm [resolvable:$true] %s130
      %133 = dma.vmem_to_hbm [thread:$0]  %s129, 128, %s131, [#allocation3]
    $region17: #{tpu_custom_call.1} parent=1 // pred_fallthru
      _
    // Predicated region
    $region18: #{tpu_custom_call.1} parent=1 // pred_check
      _
    $region19: #{tpu_custom_call.1} parent=1 // pred_check_branch
      %135 = sbr.rel (0) target = $region21
    $region20: #{tpu_custom_call.1} parent=1 // pred_region
      %137 = dma.done [#allocation3], 128
    $region21: #{tpu_custom_call.1} parent=1 // pred_fallthru
      _
    %138 = vsyncpa [#allocation3], 1

</llo_original>
